<compile_context>
chip_gen: v5e
topology: v5e:2x2
jax: 0.10.0
libtpu: 0.0.40
codegen_flags: <defaults>
</compile_context>

<pallas_src>
import functools

import jax
import jax.numpy as jnp
from jax.experimental import pallas as pl
from jax.experimental.pallas import tpu as pltpu


_LANE = 128
_SUBLANE = 8


# ----------------------------------------------------------------------------
# In-kernel counter-based RNG (int32 xor/shift/add only -> lowers everywhere)
# ----------------------------------------------------------------------------
def _logical_shr(x, n):
    """Logical (unsigned) right shift for int32 tensors."""
    return jnp.right_shift(x, n) & jnp.int32((1 << (32 - n)) - 1)


def _hash_i32(x):
    """Multiply-free 32-bit integer mix (Thomas Wang / Jenkins variant).

    int32 overflow here is intentional (two's-complement wrap under XLA).
    """
    x = x + (~(x << 15))
    x = x ^ _logical_shr(x, 10)
    x = x + (x << 3)
    x = x ^ _logical_shr(x, 6)
    x = x + (~(x << 11))
    x = x ^ _logical_shr(x, 16)
    return x


# ----------------------------------------------------------------------------
# Kernel: one grid step == `samples_per_step` MC-dropout forward passes, with
# the samples stacked along the sublane (M) axis of a single big matmul.
# ----------------------------------------------------------------------------
def mc_dropout_kernel(
    seed_ref,                 # SMEM (1,) int32 (scalar prefetch)
    x_ref,                    # VMEM (B_pad, D_in)           (resident)
    w1_ref, b1_ref,           # VMEM (D_in, H), (1, H)       (resident)
    w2_ref, b2_ref,           # VMEM (H, H),    (1, H)       (resident, w2 pre-scaled)
    w3_ref, b3_ref,           # VMEM (H, D_out_pad), (1, D_out_pad) (resident, w3 pre-scaled)
    o_ref,                    # VMEM (chunk*B_pad, D_out_pad)
    *, dropout_p: float, apply_dropout: bool, samples_per_step: int,
):
    step = pl.program_id(0)
    b_pad = x_ref.shape[0]
    h_dim = w1_ref.shape[1]
    chunk = samples_per_step
    rows = chunk * b_pad

    # ---- fc1 + ReLU: sample-independent -> compute ONCE per grid step -----
    x = x_ref[...].astype(jnp.float32)
    if x_ref.shape[1] == 1:
        # (B,1) x (1,H): outer product on the VPU; skip the K=1 MXU matmul.
        h1 = x * w1_ref[...]
    else:
        h1 = jnp.dot(x, w1_ref[...], preferred_element_type=jnp.float32)
    h1 = jnp.maximum(h1 + b1_ref[...], 0.0)            # (B_pad, H)

    # Broadcast the shared fc1 activations across this chunk's MC samples,
    # stacking them along the sublane (M) axis.
    if chunk > 1:
        h = jnp.concatenate([h1] * chunk, axis=0)       # (rows, H)
    else:
        h = h1

    drop = None
    if apply_dropout:
        # Counter base hoisted out of the dropout call sites and SHARED between
        # both dropout layers; unique per (global MC sample, batch row, column).
        row = jax.lax.broadcasted_iota(jnp.int32, (rows, h_dim), 0)
        col = jax.lax.broadcasted_iota(jnp.int32, (rows, h_dim), 1)
        global_row = row + step * jnp.int32(rows)        # distinct per MC sample
        ctr_base = (global_row << 16) + col + seed_ref[0]
        thresh = jnp.int32(min(int(round(dropout_p * (1 << 31))), (1 << 31) - 1))

        def drop(hv, layer_salt):
            # 1/(1-p) scale is folded into w2/w3 in the wrapper -> pure select.
            bits = _hash_i32(ctr_base + jnp.int32(layer_salt)) & jnp.int32(0x7FFFFFFF)
            return jnp.where(bits >= thresh, hv, jnp.float32(0.0))  # P(keep)=1-p

        h = drop(h, 0x1B873593)

    # ---- fc2 + ReLU + dropout ------------------------------------------
    h = jnp.dot(h, w2_ref[...], preferred_element_type=jnp.float32)
    h = jnp.maximum(h + b2_ref[...], 0.0)
    if apply_dropout:
        h = drop(h, 0x68E31DA4)

    # ---- fc3 (output padded to a full 128-lane width -> unmasked stores) ---
    out = jnp.dot(h, w3_ref[...], preferred_element_type=jnp.float32) + b3_ref[...]
    o_ref[...] = out.astype(o_ref.dtype)


# ----------------------------------------------------------------------------
# Wrapper
# ----------------------------------------------------------------------------
def _round_up(v, m):
    return ((v + m - 1) // m) * m


def _pick_num_chunks(num_samples, b_pad, max_rows_per_chunk=1024):
    """How many grid steps to split the MC samples into.

    >= 2 whenever possible so both v7x TensorCores get a chunk; chunk row-slab
    is kept modest (way below the scoped-VMEM limits on v5e/v6e/v7x).
    """
    if num_samples <= 1:
        return 1
    chunks = 2
    while -(-num_samples // chunks) * b_pad > max_rows_per_chunk:
        chunks *= 2
    return min(chunks, num_samples)


def mc_dropout_forward(x, params, *, num_samples=1, seed=0, dropout_p=0.1,
                       apply_dropout=True):
    """Runs `num_samples` MC-dropout forward passes in a single pallas_call.

    x: (B, input_dim) float32
    params: w1 (Din,H), b1 (1,H), w2 (H,H), b2 (1,H), w3 (H,Dout), b3 (1,Dout)
            (weights already transposed vs PyTorch, i.e. y = x @ W + b).
    Returns (num_samples, B, output_dim).
    """
    B, d_in = x.shape
    H = params["w1"].shape[1]
    d_out = params["w3"].shape[1]

    b_pad = _round_up(max(B, _SUBLANE), _SUBLANE)
    d_out_pad = _round_up(max(d_out, _LANE), _LANE)

    num_chunks = _pick_num_chunks(num_samples, b_pad)
    samples_per_chunk = -(-num_samples // num_chunks)        # ceil
    padded_samples = num_chunks * samples_per_chunk
    chunk_rows = samples_per_chunk * b_pad

    x_p = jnp.zeros((b_pad, d_in), jnp.float32).at[:B].set(x.astype(jnp.float32))

    # Fold the 1/(1-p) inverted-dropout scale into the downstream weights
    # (dropout-1 feeds fc2, dropout-2 feeds fc3); mathematically identical and
    # removes one VPU multiply per element per dropout layer in the kernel.
    scale = (1.0 / (1.0 - dropout_p)) if apply_dropout else 1.0
    w1_k = params["w1"].astype(jnp.float32)
    b1_k = params["b1"].astype(jnp.float32)
    w2_k = params["w2"].astype(jnp.float32) * jnp.float32(scale)
    b2_k = params["b2"].astype(jnp.float32)
    w3_k = params["w3"].astype(jnp.float32) * jnp.float32(scale)

    w3_p = jnp.zeros((H, d_out_pad), jnp.float32).at[:, :d_out].set(w3_k)
    b3_p = jnp.zeros((1, d_out_pad), jnp.float32).at[:, :d_out].set(
        params["b3"].astype(jnp.float32))

    seed_arr = jnp.asarray([seed], dtype=jnp.int32)

    kernel = functools.partial(
        mc_dropout_kernel,
        dropout_p=float(dropout_p),
        apply_dropout=bool(apply_dropout),
        samples_per_step=int(samples_per_chunk),
    )

    def resident(shape):
        # same block index every grid step -> fetched once, stays in VMEM
        return pl.BlockSpec(shape, lambda s, seed: (0, 0))

    out = pl.pallas_call(
        kernel,
        out_shape=jax.ShapeDtypeStruct(
            (num_chunks * chunk_rows, d_out_pad), jnp.float32),
        grid_spec=pltpu.PrefetchScalarGridSpec(
            num_scalar_prefetch=1,
            grid=(num_chunks,),
            in_specs=[
                resident((b_pad, d_in)),
                resident((d_in, H)), resident((1, H)),
                resident((H, H)), resident((1, H)),
                resident((H, d_out_pad)), resident((1, d_out_pad)),
            ],
            out_specs=pl.BlockSpec(
                (chunk_rows, d_out_pad), lambda s, seed: (s, 0)),
        ),
        compiler_params=pltpu.CompilerParams(
            dimension_semantics=("parallel",),   # sample chunks are independent
        ),
    )(
        seed_arr,
        x_p,
        w1_k, b1_k,
        w2_k, b2_k,
        w3_p, b3_p,
    )
    out = out.reshape(padded_samples, b_pad, d_out_pad)
    return out[:num_samples, :B, :d_out]


# ----------------------------------------------------------------------------
# Init + pure-JAX reference
# ----------------------------------------------------------------------------
def init_params(key, input_dim=1, hidden_dim=64, output_dim=1):
    """PyTorch nn.Linear-style init (uniform +/- 1/sqrt(fan_in)).

    Weights are stored as (in_features, out_features) == PyTorch weight.T
    """
    ks = jax.random.split(key, 6)

    def lin(kw, kb, fan_in, fan_out):
        bound = 1.0 / float(fan_in) ** 0.5
        w = jax.random.uniform(kw, (fan_in, fan_out), jnp.float32, -bound, bound)
        b = jax.random.uniform(kb, (1, fan_out), jnp.float32, -bound, bound)
        return w, b

    w1, b1 = lin(ks[0], ks[1], input_dim, hidden_dim)
    w2, b2 = lin(ks[2], ks[3], hidden_dim, hidden_dim)
    w3, b3 = lin(ks[4], ks[5], hidden_dim, output_dim)
    return {"w1": w1, "b1": b1, "w2": w2, "b2": b2, "w3": w3, "b3": b3}


def reference_forward(x, params):
    """Pure-JAX reference with dropout disabled (eval mode)."""
    h = jnp.maximum(x @ params["w1"] + params["b1"], 0.0)
    h = jnp.maximum(h @ params["w2"] + params["b2"], 0.0)
    return h @ params["w3"] + params["b3"]


if __name__ == "__main__":
    key = jax.random.PRNGKey(0)
    k_param, k_x = jax.random.split(key)

    B, INPUT_DIM, HIDDEN_DIM, OUTPUT_DIM = 8, 1, 64, 1
    DROPOUT_P = 0.1
    NUM_SAMPLES = 16

    params = init_params(k_param, INPUT_DIM, HIDDEN_DIM, OUTPUT_DIM)
    x = jax.random.normal(k_x, (B, INPUT_DIM), dtype=jnp.float32)

    # Deterministic (eval-mode) pass: dropout off; check against pure-JAX ref.
    y_det = mc_dropout_forward(
        x, params, num_samples=1, seed=0, dropout_p=DROPOUT_P, apply_dropout=False
    )
    y_det = jax.block_until_ready(y_det)
    y_ref = reference_forward(x, params)
    assert y_det.shape == (1, B, OUTPUT_DIM)
    assert jnp.allclose(y_det[0], y_ref, atol=1e-5, rtol=1e-5), "mismatch vs reference"

    # MC-dropout: NUM_SAMPLES stochastic forward passes in ONE pallas_call
    # (2 grid steps x 8 samples stacked along the M axis).
    y_mc = mc_dropout_forward(
        x, params, num_samples=NUM_SAMPLES, seed=1234,
        dropout_p=DROPOUT_P, apply_dropout=True,
    )
    y_mc = jax.block_until_ready(y_mc)
    assert y_mc.shape == (NUM_SAMPLES, B, OUTPUT_DIM)
    assert bool(jnp.isfinite(y_mc).all())
    # different MC samples must use different dropout masks
    assert float(jnp.max(jnp.std(y_mc, axis=0))) > 0.0

    print("KERNEL_OK")
</pallas_src>

<mosaic_0001>
module attributes {stable_mosaic.version = 11 : i64} {
  func.func @mc_dropout_kernel(%arg0: i32, %arg1: memref<1xi32, #tpu.memory_space<smem>>, %arg2: memref<8x1xf32, #tpu.memory_space<vmem>>, %arg3: memref<1x64xf32, #tpu.memory_space<vmem>>, %arg4: memref<1x64xf32, #tpu.memory_space<vmem>>, %arg5: memref<64x64xf32, #tpu.memory_space<vmem>>, %arg6: memref<1x64xf32, #tpu.memory_space<vmem>>, %arg7: memref<64x128xf32, #tpu.memory_space<vmem>>, %arg8: memref<1x128xf32, #tpu.memory_space<vmem>>, %arg9: memref<8x128xf32, #tpu.memory_space<vmem>>) attributes {dimension_semantics = [#tpu.dimension_semantics<parallel>], iteration_bounds = array<i64: 1>, scalar_prefetch = 1 : i64, scratch_operands = 0 : i64, tpu.core_type = #tpu.core_type<tc>, window_params = [{pipeline_mode = #tpu.pipeline_mode<synchronous>, transform_indices = @transform_0, window_bounds = array<i64: 8, 1>}, {pipeline_mode = #tpu.pipeline_mode<synchronous>, transform_indices = @transform_1, window_bounds = array<i64: 1, 64>}, {pipeline_mode = #tpu.pipeline_mode<synchronous>, transform_indices = @transform_2, window_bounds = array<i64: 1, 64>}, {pipeline_mode = #tpu.pipeline_mode<synchronous>, transform_indices = @transform_3, window_bounds = array<i64: 64, 64>}, {pipeline_mode = #tpu.pipeline_mode<synchronous>, transform_indices = @transform_4, window_bounds = array<i64: 1, 64>}, {pipeline_mode = #tpu.pipeline_mode<synchronous>, transform_indices = @transform_5, window_bounds = array<i64: 64, 128>}, {pipeline_mode = #tpu.pipeline_mode<synchronous>, transform_indices = @transform_6, window_bounds = array<i64: 1, 128>}, {transform_indices = @transform_7, window_bounds = array<i64: 8, 128>}]} {
    %c0 = arith.constant 0 : index
    %c0_0 = arith.constant 0 : index
    %0 = vector.load %arg2[%c0, %c0_0] : memref<8x1xf32, #tpu.memory_space<vmem>>, vector<8x1xf32>
    %c0_1 = arith.constant 0 : index
    %c0_2 = arith.constant 0 : index
    %1 = vector.load %arg3[%c0_1, %c0_2] : memref<1x64xf32, #tpu.memory_space<vmem>>, vector<1x64xf32>
    %2 = vector.broadcast %0 : vector<8x1xf32> to vector<8x64xf32>
    %3 = vector.broadcast %1 : vector<1x64xf32> to vector<8x64xf32>
    %4 = arith.mulf %2, %3 : vector<8x64xf32>
    %c0_3 = arith.constant 0 : index
    %c0_4 = arith.constant 0 : index
    %5 = vector.load %arg4[%c0_3, %c0_4] : memref<1x64xf32, #tpu.memory_space<vmem>>, vector<1x64xf32>
    %6 = vector.broadcast %5 : vector<1x64xf32> to vector<8x64xf32>
    %7 = arith.addf %4, %6 : vector<8x64xf32>
    %cst = arith.constant 0.000000e+00 : f32
    %8 = vector.broadcast %cst : f32 to vector<8x64xf32>
    %9 = arith.maximumf %7, %8 : vector<8x64xf32>
    %c0_5 = arith.constant 0 : index
    %c0_6 = arith.constant 0 : index
    %10 = vector.load %arg5[%c0_5, %c0_6] : memref<64x64xf32, #tpu.memory_space<vmem>>, vector<64x64xf32>
    %cst_7 = arith.constant dense<0.000000e+00> : vector<8x64xf32>
    %11 = tpu.matmul %9, %10, %cst_7 {dimension_numbers = #tpu.dot_dimension_numbers<[1], [0], [0], [1], [0, 0, 1, 1], [], []>} : vector<8x64xf32>, vector<64x64xf32>, vector<8x64xf32> -> vector<8x64xf32>
    %c0_8 = arith.constant 0 : index
    %c0_9 = arith.constant 0 : index
    %12 = vector.load %arg6[%c0_8, %c0_9] : memref<1x64xf32, #tpu.memory_space<vmem>>, vector<1x64xf32>
    %13 = vector.broadcast %12 : vector<1x64xf32> to vector<8x64xf32>
    %14 = arith.addf %11, %13 : vector<8x64xf32>
    %cst_10 = arith.constant 0.000000e+00 : f32
    %15 = vector.broadcast %cst_10 : f32 to vector<8x64xf32>
    %16 = arith.maximumf %14, %15 : vector<8x64xf32>
    %c0_11 = arith.constant 0 : index
    %c0_12 = arith.constant 0 : index
    %17 = vector.load %arg7[%c0_11, %c0_12] : memref<64x128xf32, #tpu.memory_space<vmem>>, vector<64x128xf32>
    %cst_13 = arith.constant dense<0.000000e+00> : vector<8x128xf32>
    %18 = tpu.matmul %16, %17, %cst_13 {dimension_numbers = #tpu.dot_dimension_numbers<[1], [0], [0], [1], [0, 0, 1, 1], [], []>} : vector<8x64xf32>, vector<64x128xf32>, vector<8x128xf32> -> vector<8x128xf32>
    %c0_14 = arith.constant 0 : index
    %c0_15 = arith.constant 0 : index
    %19 = vector.load %arg8[%c0_14, %c0_15] : memref<1x128xf32, #tpu.memory_space<vmem>>, vector<1x128xf32>
    %20 = vector.broadcast %19 : vector<1x128xf32> to vector<8x128xf32>
    %21 = arith.addf %18, %20 : vector<8x128xf32>
    %c0_16 = arith.constant 0 : index
    %c0_17 = arith.constant 0 : index
    %22 = vector.load %arg9[%c0_16, %c0_17] : memref<8x128xf32, #tpu.memory_space<vmem>>, vector<8x128xf32>
    tpu.vector_store %arg9[%c0_16, %c0_17], %21 {strides = array<i32>} : memref<8x128xf32, #tpu.memory_space<vmem>>, vector<8x128xf32>,
    return
  }
  func.func @transform_0(%arg0: i32, %arg1: memref<1xi32, #tpu.memory_space<smem>>) -> (i32, i32) {
    %c0_i32 = arith.constant 0 : i32
    %c0_i32_0 = arith.constant 0 : i32
    %c0_i32_1 = arith.constant 0 : i32
    return %c0_i32, %c0_i32_0 : i32, i32
  }
  func.func @transform_1(%arg0: i32, %arg1: memref<1xi32, #tpu.memory_space<smem>>) -> (i32, i32) {
    %c0_i32 = arith.constant 0 : i32
    %c0_i32_0 = arith.constant 0 : i32
    %c0_i32_1 = arith.constant 0 : i32
    return %c0_i32, %c0_i32_0 : i32, i32
  }
  func.func @transform_2(%arg0: i32, %arg1: memref<1xi32, #tpu.memory_space<smem>>) -> (i32, i32) {
    %c0_i32 = arith.constant 0 : i32
    %c0_i32_0 = arith.constant 0 : i32
    %c0_i32_1 = arith.constant 0 : i32
    return %c0_i32, %c0_i32_0 : i32, i32
  }
  func.func @transform_3(%arg0: i32, %arg1: memref<1xi32, #tpu.memory_space<smem>>) -> (i32, i32) {
    %c0_i32 = arith.constant 0 : i32
    %c0_i32_0 = arith.constant 0 : i32
    %c0_i32_1 = arith.constant 0 : i32
    return %c0_i32, %c0_i32_0 : i32, i32
  }
  func.func @transform_4(%arg0: i32, %arg1: memref<1xi32, #tpu.memory_space<smem>>) -> (i32, i32) {
    %c0_i32 = arith.constant 0 : i32
    %c0_i32_0 = arith.constant 0 : i32
    %c0_i32_1 = arith.constant 0 : i32
    return %c0_i32, %c0_i32_0 : i32, i32
  }
  func.func @transform_5(%arg0: i32, %arg1: memref<1xi32, #tpu.memory_space<smem>>) -> (i32, i32) {
    %c0_i32 = arith.constant 0 : i32
    %c0_i32_0 = arith.constant 0 : i32
    %c0_i32_1 = arith.constant 0 : i32
    return %c0_i32, %c0_i32_0 : i32, i32
  }
  func.func @transform_6(%arg0: i32, %arg1: memref<1xi32, #tpu.memory_space<smem>>) -> (i32, i32) {
    %c0_i32 = arith.constant 0 : i32
    %c0_i32_0 = arith.constant 0 : i32
    %c0_i32_1 = arith.constant 0 : i32
    return %c0_i32, %c0_i32_0 : i32, i32
  }
  func.func @transform_7(%arg0: i32, %arg1: memref<1xi32, #tpu.memory_space<smem>>) -> (i32, i32) {
    %c0_i32 = arith.constant 0 : i32
    %c0_i32_0 = arith.constant 0 : i32
    return %arg0, %c0_i32 : i32, i32
  }
}

</mosaic_0001>

<llo_original>
// kernel: tpu_custom_call.1
$region0: #{tpu_custom_call.1}
  #allocation0 [shape = 'u32[]', space=smem, size = 0x4, offset = 0x4, fixed_abs, tag = 'smem constant byte address 0x4 - core index']
  #allocation1 [shape = 'u32[72,128]{1,0:T(1,128)}', space=vmem, size = 0x9000, scoped, tag = 'internal scratch']
  #allocation2 [shape = 's32[1]{0}', space=sflag, size = 0x4, scoped, tag = 'scoped memory for tpu_custom_call.1']
  #allocation3 [shape = 's32[1]{0:T(128)S(6)}', space=smem, size = 0x200, scoped, tag = 'prefetched SMEM operand 0']
  %s0 = inlined_call_operand.<no memory space> [shape: s32[1], index: 0, kind: input, shape index: {}]
  %s1 = inlined_call_operand.vmem [shape: f32[8,1], index: 1, kind: input, shape index: {}]
  %s2 = inlined_call_operand.vmem [shape: f32[1,64], index: 2, kind: input, shape index: {}]
  %s3 = inlined_call_operand.vmem [shape: f32[1,64], index: 3, kind: input, shape index: {}]
  %s4 = inlined_call_operand.hbm [shape: f32[64,64], index: 4, kind: input, shape index: {}]
  %s5 = inlined_call_operand.vmem [shape: f32[1,64], index: 5, kind: input, shape index: {}]
  %s6 = inlined_call_operand.hbm [shape: f32[64,128], index: 6, kind: input, shape index: {}]
  %s7 = inlined_call_operand.vmem [shape: f32[1,128], index: 7, kind: input, shape index: {}]
  %s8 = inlined_call_operand.hbm [shape: f32[8,128], index: 8, kind: output, shape index: {}]
  %s9 = sld [smem:[#allocation0]]
  $region46: #{tpu_custom_call.1} parent=0
    _
  %s11 = ssub.s32 1, %s9
  %s12 = scalar_select 0, %s11, %s9
  %13 = sst [smem:[#allocation3]] %s0
  $region1: #{tpu_custom_call.1} parent=0
    #allocation4 [shape = 'u8[32768]{0}', space=vmem, size = 0x8000, scoped, tag = 'input window, operand 4, single buffered']
    #allocation5 [shape = 's32[1]{0}', space=sflag, size = 0x4, scoped, tag = 'scoped memory for tpu_custom_call.1']
    #allocation6 [shape = 's32[1]{0}', space=sflag, size = 0x4, scoped, tag = 'scoped memory for tpu_custom_call.1']
    #allocation7 [shape = 'u8[32768]{0}', space=vmem, size = 0x8000, scoped, tag = 'input window, operand 6, single buffered']
    #allocation8 [shape = 's32[1]{0}', space=sflag, size = 0x4, scoped, tag = 'scoped memory for tpu_custom_call.1']
    #allocation9 [shape = 'u8[4096]{0}', space=vmem, size = 0x1000, scoped, tag = 'output window, operand 0, single buffered']
    %14 = vsyncpa [#allocation5], 0
    %15 = vsyncpa [#allocation8], 0
    %16 = vsyncpa [#allocation6], 0
    // Predicated region
    $region2: #{tpu_custom_call.1} parent=1 // pred_check
      _
    $region3: #{tpu_custom_call.1} parent=1 // pred_check_branch
      %18 = sbr.rel (0) target = $region5
    $region4: #{tpu_custom_call.1} parent=1 // pred_region
      _
    $region5: #{tpu_custom_call.1} parent=1 // pred_fallthru
      _
    // Predicated region
    $region6: #{tpu_custom_call.1} parent=1 // pred_check
      _
    $region7: #{tpu_custom_call.1} parent=1 // pred_check_branch
      %20 = sbr.rel (0) target = $region9
    $region8: #{tpu_custom_call.1} parent=1 // pred_region
      _
    $region9: #{tpu_custom_call.1} parent=1 // pred_fallthru
      _
    // Predicated region
    $region10: #{tpu_custom_call.1} parent=1 // pred_check
      _
    $region11: #{tpu_custom_call.1} parent=1 // pred_check_branch
      %22 = sbr.rel (0) target = $region13
    $region12: #{tpu_custom_call.1} parent=1 // pred_region
      _
    $region13: #{tpu_custom_call.1} parent=1 // pred_fallthru
      _
    // Predicated region
    $region14: #{tpu_custom_call.1} parent=1 // pred_check
      _
    $region15: #{tpu_custom_call.1} parent=1 // pred_check_branch
      %24 = sbr.rel (0) target = $region17
    $region16: #{tpu_custom_call.1} parent=1 // pred_region
      %26 = vsyncadd [#allocation5], 0
      %s27 = sshll.u32 %s4, 4
      %s28 = int_to_ptr.hbm [resolvable:$true] %s27
      %s29 = sshll.u32 [#allocation4], 4
      %s30 = int_to_ptr.vmem [resolvable:$true] %s29
      %35 = dma.hbm_to_vmem [thread:$0]  %s28, 1024, %s30, [#allocation5], 128, 128, 8
    $region17: #{tpu_custom_call.1} parent=1 // pred_fallthru
      _
    // Predicated region
    $region18: #{tpu_custom_call.1} parent=1 // pred_check
      _
    $region19: #{tpu_custom_call.1} parent=1 // pred_check_branch
      %37 = sbr.rel (0) target = $region21
    $region20: #{tpu_custom_call.1} parent=1 // pred_region
      _
    $region21: #{tpu_custom_call.1} parent=1 // pred_fallthru
      _
    // Predicated region
    $region22: #{tpu_custom_call.1} parent=1 // pred_check
      _
    $region23: #{tpu_custom_call.1} parent=1 // pred_check_branch
      %39 = sbr.rel (0) target = $region25
    $region24: #{tpu_custom_call.1} parent=1 // pred_region
      %41 = vsyncadd [#allocation8], 0
      %s42 = sshll.u32 %s6, 4
      %s43 = int_to_ptr.hbm [resolvable:$true] %s42
      %s44 = sshll.u32 [#allocation7], 4
      %s45 = int_to_ptr.vmem [resolvable:$true] %s44
      %50 = dma.hbm_to_vmem [thread:$0]  %s43, 1024, %s45, [#allocation8], 128, 128, 8
    $region25: #{tpu_custom_call.1} parent=1 // pred_fallthru
      _
    // Predicated region
    $region26: #{tpu_custom_call.1} parent=1 // pred_check
      _
    $region27: #{tpu_custom_call.1} parent=1 // pred_check_branch
      %52 = sbr.rel (0) target = $region29
    $region28: #{tpu_custom_call.1} parent=1 // pred_region
      _
    $region29: #{tpu_custom_call.1} parent=1 // pred_fallthru
      _
    // Predicated region
    $region30: #{tpu_custom_call.1} parent=1 // pred_check
      _
    $region31: #{tpu_custom_call.1} parent=1 // pred_check_branch
      %54 = sbr.rel (0) target = $region33
    $region32: #{tpu_custom_call.1} parent=1 // pred_region
      %56 = dma.done [#allocation5], 1024
    $region33: #{tpu_custom_call.1} parent=1 // pred_fallthru
      _
    // Predicated region
    $region34: #{tpu_custom_call.1} parent=1 // pred_check
      _
    $region35: #{tpu_custom_call.1} parent=1 // pred_check_branch
      %58 = sbr.rel (0) target = $region37
    $region36: #{tpu_custom_call.1} parent=1 // pred_region
      %60 = dma.done [#allocation8], 1024
    $region37: #{tpu_custom_call.1} parent=1 // pred_fallthru
      _
    %v61 = vld [vmem:[%s1] sm:$0xff]
    %v62 = vld [vmem:[%s2] sm:$0x1]
    %64 = vset.pattern.permute.xlu0 0
    %65 = vperm.xlu0 %64, %v61
    %v66 = vpop.permute.xlu0 %65
    %v69 = vperm.slane %v62, 0
    %v71 = vmul.f32 %v66, %v69
    %v72 = vld [vmem:[%s3] sm:$0x1]
    %v74 = vperm.slane %v72, 0
    %v76 = vadd.f32 %v71, %v74
    %v77 = vmax.f32 %v76, 0.0
    %v78 = vld [vmem:[#allocation4] sm:$0xff]
    %v79 = vld [vmem:[#allocation4 + $0x8] sm:$0xff]
    %v80 = vld [vmem:[#allocation4 + $0x10] sm:$0xff]
    %v81 = vld [vmem:[#allocation4 + $0x18] sm:$0xff]
    %v82 = vld [vmem:[#allocation4 + $0x20] sm:$0xff]
    %v83 = vld [vmem:[#allocation4 + $0x28] sm:$0xff]
    %v84 = vld [vmem:[#allocation4 + $0x30] sm:$0xff]
    %v85 = vld [vmem:[#allocation4 + $0x38] sm:$0xff]
    %v86 = vld [vmem:[%s5] sm:$0x1]
    %v88 = vperm.slane %v86, 0
    %vm90 = vcmask 523264
    %v92 = vsel %vm90, %v77, 0
    %94 = vmatpush.msra.mxu0 0.0
    %95 = vmatpush.msra.mxu0 0.0
    %96 = vmatpush.msra.mxu0 0.0
    %97 = vmatpush.msra.mxu0 0.0
    %98 = vmatpush.msra.mxu0 0.0
    %99 = vmatpush.msra.mxu0 0.0
    %100 = vmatpush.msra.mxu0 0.0
    %101 = vmatpush.msra.mxu0 0.0
    %102 = vmatpush.msra.mxu0 %v85
    %103 = vmatpush.msra.mxu0 %v84
    %104 = vmatpush.msra.mxu0 %v83
    %105 = vmatpush.msra.mxu0 %v82
    %106 = vmatpush.msra.mxu0 %v81
    %107 = vmatpush.msra.mxu0 %v80
    %108 = vmatpush.msra.mxu0 %v79
    %109 = vmatpush.msra.mxu0 %v78
    %110 = vmatmul.f32.gmra.mxu0 %v92
    %v111 = vpop.f32.mrf.mxu0
    %v112 = vadd.f32 %v88, %v111
    %113 = vdwg.mxu0
    %v114 = vmax.f32 %v112, 0.0
    %v115 = vld [vmem:[#allocation7] sm:$0xff]
    %v116 = vld [vmem:[#allocation7 + $0x8] sm:$0xff]
    %v117 = vld [vmem:[#allocation7 + $0x10] sm:$0xff]
    %v118 = vld [vmem:[#allocation7 + $0x18] sm:$0xff]
    %v119 = vld [vmem:[#allocation7 + $0x20] sm:$0xff]
    %v120 = vld [vmem:[#allocation7 + $0x28] sm:$0xff]
    %v121 = vld [vmem:[#allocation7 + $0x30] sm:$0xff]
    %v122 = vld [vmem:[#allocation7 + $0x38] sm:$0xff]
    %v123 = vld [vmem:[%s7] sm:$0x1]
    %v125 = vperm.slane %v123, 0
    %v128 = vsel %vm90, %v114, 0
    %130 = vmatpush.msra.mxu0 0.0
    %131 = vmatpush.msra.mxu0 0.0
    %132 = vmatpush.msra.mxu0 0.0
    %133 = vmatpush.msra.mxu0 0.0
    %134 = vmatpush.msra.mxu0 0.0
    %135 = vmatpush.msra.mxu0 0.0
    %136 = vmatpush.msra.mxu0 0.0
    %137 = vmatpush.msra.mxu0 0.0
    %138 = vmatpush.msra.mxu0 %v122
    %139 = vmatpush.msra.mxu0 %v121
    %140 = vmatpush.msra.mxu0 %v120
    %141 = vmatpush.msra.mxu0 %v119
    %142 = vmatpush.msra.mxu0 %v118
    %143 = vmatpush.msra.mxu0 %v117
    %144 = vmatpush.msra.mxu0 %v116
    %145 = vmatpush.msra.mxu0 %v115
    %146 = vmatmul.f32.gmra.mxu0 %v128
    %v147 = vpop.f32.mrf.mxu0
    %v148 = vadd.f32 %v125, %v147
    %149 = vdwg.mxu0
    %150 = vst [vmem:[#allocation9] sm:$0xff] %v148
    // Predicated region
    $region38: #{tpu_custom_call.1} parent=1 // pred_check
      _
    $region39: #{tpu_custom_call.1} parent=1 // pred_check_branch
      %152 = sbr.rel (0) target = $region41
    $region40: #{tpu_custom_call.1} parent=1 // pred_region
      %154 = vsyncadd [#allocation6], 0
      %s156 = sshll.u32 [#allocation9], 4
      %s157 = int_to_ptr.vmem [resolvable:$true] %s156
      %s158 = sshll.u32 %s8, 4
      %s159 = int_to_ptr.hbm [resolvable:$true] %s158
      %161 = dma.vmem_to_hbm [thread:$0]  %s157, 128, %s159, [#allocation6]
    $region41: #{tpu_custom_call.1} parent=1 // pred_fallthru
      _
    // Predicated region
    $region42: #{tpu_custom_call.1} parent=1 // pred_check
      _
    $region43: #{tpu_custom_call.1} parent=1 // pred_check_branch
      %163 = sbr.rel (0) target = $region45
    $region44: #{tpu_custom_call.1} parent=1 // pred_region
      %165 = dma.done [#allocation6], 128
    $region45: #{tpu_custom_call.1} parent=1 // pred_fallthru
      _
    %166 = vsyncpa [#allocation5], 1
    %167 = vsyncpa [#allocation8], 1
    %168 = vsyncpa [#allocation6], 1

</llo_original>
